<compile_context>
chip_gen: v7x
topology: tpu7x:2x2x1
jax: 0.10.0
libtpu: 0.0.40
codegen_flags: <defaults>
</compile_context>

<pallas_src>
import functools
import math

import jax
import jax.numpy as jnp
import numpy as np
from jax.experimental import pallas as pl
from jax.experimental.pallas import tpu as pltpu

LANE = 128
MAX_LANES = 4096               # widest lane-dense tile we consider
MAX_TILE_BYTES = 4 << 20       # per-buffer tile cap (~4 MiB)
VMEM_BUDGET_BYTES = 40 << 20   # budget for all double-buffered operands
VMEM_LIMIT_BYTES = 48 << 20    # scoped VMEM request (headroom under v7x 64 MiB)


def _convex_comb_kernel(n, comb_ref, *refs):
    # comb_ref: (n,) f32 in SMEM; refs = n input tiles (tm, tn) + 1 output tile.
    x_refs, o_ref = refs[:n], refs[n]
    # Hoist the scalar SMEM reads out of the unrolled multiply-add chain.
    c = [comb_ref[i] for i in range(n)]
    acc = x_refs[0][...].astype(jnp.float32) * c[0]
    for i in range(1, n):                     # n is static -> fully unrolled
        acc = acc + x_refs[i][...].astype(jnp.float32) * c[i]
    o_ref[...] = acc.astype(o_ref.dtype)


def _tile_layout(size, itemsize, n):
    """Pick an exactly-tiling, lane-dense (tm, tn) layout for `size` elements.

    Requires size % LANE == 0 (checked by the caller)."""
    sub = max(8, 32 // itemsize)  # sublane multiple: 8 for f32, 16 for bf16
    # Per-buffer tile budget: n inputs + 1 output, double-buffered.
    tile_bytes = min(MAX_TILE_BYTES, VMEM_BUDGET_BYTES // (2 * (n + 1)))
    tile_elems = max(sub * LANE, tile_bytes // itemsize)

    # Largest 128-multiple lane width that exactly divides size (=> no padding),
    # preferring widths that leave at least `sub` rows so sublanes stay dense.
    hi = min(MAX_LANES, tile_elems, size)
    divisors = [d for d in range(LANE, hi + 1, LANE) if size % d == 0]
    dense = [d for d in divisors if size // d >= sub]
    tn = max(dense) if dense else max(divisors)
    rows = size // tn

    tm_budget = max(sub, (tile_elems // tn) // sub * sub)
    if rows <= tm_budget:
        if rows >= 2 * sub:
            # Split into >= 2 row-tiles so the "parallel" grid axis can shard
            # across both TensorCores on v7x megacore.
            half = -(-rows // 2)
            tm = -(-half // sub) * sub
        else:
            tm = rows            # full row dim -> no sublane constraint
    else:
        tm = tm_budget
    grid = -(-rows // tm)        # non-dividing last block is fine (elementwise:
    return tm, tn, rows, grid    # OOB reads padded, OOB writes masked)


def convex_combination(inputs, comb):
    """Pallas equivalent of ConvexCombination.forward(*inputs)."""
    n = len(inputs)
    assert comb.shape == (n,)
    orig_shape = inputs[0].shape
    dtype = inputs[0].dtype
    for x in inputs:
        assert x.shape == orig_shape and x.dtype == dtype

    size = math.prod(orig_shape)
    itemsize = jnp.dtype(dtype).itemsize
    comb = comb.astype(jnp.float32)

    if size == 0 or size % LANE != 0:
        # No 128-multiple tiling exists without padding.  A single fused XLA
        # elementwise pass is already HBM-roofline optimal for this op and
        # avoids any extra pad/slice/concat traffic.
        out = sum(jnp.ravel(inputs[i]).astype(jnp.float32) * comb[i]
                  for i in range(n))
        return out.astype(dtype).reshape(orig_shape)

    tm, tn, rows, grid = _tile_layout(size, itemsize, n)

    # Contiguous reshape to a lane-dense 2D slab: free (no data movement).
    prepped = [jnp.ravel(x).reshape(rows, tn) for x in inputs]

    kernel = functools.partial(_convex_comb_kernel, n)
    tile_spec = pl.BlockSpec((tm, tn), lambda i: (i, 0))

    out = pl.pallas_call(
        kernel,
        out_shape=jax.ShapeDtypeStruct((rows, tn), dtype),
        grid=(grid,),
        in_specs=[
            # small weight vector lives in SMEM, whole array every grid step
            pl.BlockSpec(memory_space=pltpu.MemorySpace.SMEM),
        ] + [tile_spec] * n,
        out_specs=tile_spec,
        compiler_params=pltpu.CompilerParams(
            dimension_semantics=("parallel",),
            vmem_limit_bytes=VMEM_LIMIT_BYTES,
        ),
        cost_estimate=pl.CostEstimate(
            flops=2 * n * size,
            transcendentals=0,
            bytes_accessed=(n + 1) * size * itemsize,
        ),
    )(comb, *prepped)

    return out.reshape(orig_shape)


if __name__ == "__main__":
    n = 3
    shape = (2, 4, 16, 16)  # NCHW, small synthetic inputs

    key = jax.random.PRNGKey(0)
    keys = jax.random.split(key, n)
    inputs = [jax.random.normal(k, shape, dtype=jnp.float32) for k in keys]

    # Deterministic parameter init, matching nn.Parameter(torch.ones(n) / n).
    comb = jnp.ones((n,), dtype=jnp.float32) / n

    out = convex_combination(inputs, comb)
    out = jax.block_until_ready(out)

    # Reference (plain JAX) check of the forward semantics.
    ref = sum(inputs[i] * comb[i] for i in range(n))
    np.testing.assert_allclose(np.asarray(out), np.asarray(ref), rtol=1e-6, atol=1e-6)

    print("KERNEL_OK")
</pallas_src>

<mosaic_0001>
module attributes {stable_mosaic.version = 11 : i64} {
  func.func @_convex_comb_kernel(%arg0: i32, %arg1: memref<3xf32, #tpu.memory_space<smem>>, %arg2: memref<8x256xf32, #tpu.memory_space<vmem>>, %arg3: memref<8x256xf32, #tpu.memory_space<vmem>>, %arg4: memref<8x256xf32, #tpu.memory_space<vmem>>, %arg5: memref<8x256xf32, #tpu.memory_space<vmem>>) attributes {dimension_semantics = [#tpu.dimension_semantics<parallel>], iteration_bounds = array<i64: 1>, scalar_prefetch = 0 : i64, scratch_operands = 0 : i64, tpu.core_type = #tpu.core_type<tc>, window_params = [{transform_indices = @transform_0, window_bounds = array<i64: 3>}, {transform_indices = @transform_1, window_bounds = array<i64: 8, 256>}, {transform_indices = @transform_2, window_bounds = array<i64: 8, 256>}, {transform_indices = @transform_3, window_bounds = array<i64: 8, 256>}, {transform_indices = @transform_4, window_bounds = array<i64: 8, 256>}]} {
    %c0 = arith.constant 0 : index
    %0 = memref.load %arg1[%c0] : memref<3xf32, #tpu.memory_space<smem>>
    %c1 = arith.constant 1 : index
    %1 = memref.load %arg1[%c1] : memref<3xf32, #tpu.memory_space<smem>>
    %c2 = arith.constant 2 : index
    %2 = memref.load %arg1[%c2] : memref<3xf32, #tpu.memory_space<smem>>
    %c0_0 = arith.constant 0 : index
    %c0_1 = arith.constant 0 : index
    %3 = vector.load %arg2[%c0_0, %c0_1] : memref<8x256xf32, #tpu.memory_space<vmem>>, vector<8x256xf32>
    %4 = vector.broadcast %0 : f32 to vector<8x256xf32>
    %5 = arith.mulf %3, %4 : vector<8x256xf32>
    %c0_2 = arith.constant 0 : index
    %c0_3 = arith.constant 0 : index
    %6 = vector.load %arg3[%c0_2, %c0_3] : memref<8x256xf32, #tpu.memory_space<vmem>>, vector<8x256xf32>
    %7 = vector.broadcast %1 : f32 to vector<8x256xf32>
    %8 = arith.mulf %6, %7 : vector<8x256xf32>
    %9 = arith.addf %5, %8 : vector<8x256xf32>
    %c0_4 = arith.constant 0 : index
    %c0_5 = arith.constant 0 : index
    %10 = vector.load %arg4[%c0_4, %c0_5] : memref<8x256xf32, #tpu.memory_space<vmem>>, vector<8x256xf32>
    %11 = vector.broadcast %2 : f32 to vector<8x256xf32>
    %12 = arith.mulf %10, %11 : vector<8x256xf32>
    %13 = arith.addf %9, %12 : vector<8x256xf32>
    %c0_6 = arith.constant 0 : index
    %c0_7 = arith.constant 0 : index
    %14 = vector.load %arg5[%c0_6, %c0_7] : memref<8x256xf32, #tpu.memory_space<vmem>>, vector<8x256xf32>
    tpu.vector_store %arg5[%c0_6, %c0_7], %13 {strides = array<i32>} : memref<8x256xf32, #tpu.memory_space<vmem>>, vector<8x256xf32>,
    return
  }
  func.func @transform_0(%arg0: i32) -> i32 {
    %c0_i32 = arith.constant 0 : i32
    %c0_i32_0 = arith.constant 0 : i32
    return %c0_i32 : i32
  }
  func.func @transform_1(%arg0: i32) -> (i32, i32) {
    %c0_i32 = arith.constant 0 : i32
    %c0_i32_0 = arith.constant 0 : i32
    return %arg0, %c0_i32 : i32, i32
  }
  func.func @transform_2(%arg0: i32) -> (i32, i32) {
    %c0_i32 = arith.constant 0 : i32
    %c0_i32_0 = arith.constant 0 : i32
    return %arg0, %c0_i32 : i32, i32
  }
  func.func @transform_3(%arg0: i32) -> (i32, i32) {
    %c0_i32 = arith.constant 0 : i32
    %c0_i32_0 = arith.constant 0 : i32
    return %arg0, %c0_i32 : i32, i32
  }
  func.func @transform_4(%arg0: i32) -> (i32, i32) {
    %c0_i32 = arith.constant 0 : i32
    %c0_i32_0 = arith.constant 0 : i32
    return %arg0, %c0_i32 : i32, i32
  }
}

</mosaic_0001>

<llo_original>
// kernel: tpu_custom_call.1
$region0: #{tpu_custom_call.1}
  #allocation0 [shape = 'u32[]', space=smem, size = 0x4, offset = 0x4, fixed_abs, tag = 'smem constant byte address 0x4 - core index']
  #allocation1 [shape = 'u32[144,128]{1,0:T(1,128)}', space=vmem, size = 0x12000, scoped, tag = 'internal scratch']
  %s0 = inlined_call_operand.hbm [shape: f32[3], index: 0, kind: input, shape index: {}]
  %s1 = inlined_call_operand.hbm [shape: f32[8,256], index: 1, kind: input, shape index: {}]
  %s2 = inlined_call_operand.hbm [shape: f32[8,256], index: 2, kind: input, shape index: {}]
  %s3 = inlined_call_operand.hbm [shape: f32[8,256], index: 3, kind: input, shape index: {}]
  %s4 = inlined_call_operand.hbm [shape: f32[8,256], index: 4, kind: output, shape index: {}]
  %s5 = sld [smem:[#allocation0]]
  $region42: #{tpu_custom_call.1} parent=0
    _
  %s7 = ssub.s32 1, %s5
  %s8 = scalar_select 0, %s7, %s5
  $region1: #{tpu_custom_call.1} parent=0
    #allocation2 [shape = 'u8[512]{0}', space=smem, size = 0x200, scoped, tag = 'input window, operand 0, single buffered']
    #allocation3 [shape = 's32[1]{0}', space=sflag, size = 0x4, scoped, tag = 'scoped memory for tpu_custom_call.1']
    #allocation4 [shape = 's32[1]{0}', space=sflag, size = 0x4, scoped, tag = 'scoped memory for tpu_custom_call.1']
    #allocation5 [shape = 's32[1]{0}', space=sflag, size = 0x4, scoped, tag = 'scoped memory for tpu_custom_call.1']
    #allocation6 [shape = 'u8[8192]{0}', space=vmem, size = 0x2000, scoped, tag = 'input window, operand 1, single buffered']
    #allocation7 [shape = 'u8[8192]{0}', space=vmem, size = 0x2000, scoped, tag = 'input window, operand 2, single buffered']
    #allocation8 [shape = 's32[1]{0}', space=sflag, size = 0x4, scoped, tag = 'scoped memory for tpu_custom_call.1']
    #allocation9 [shape = 'u8[8192]{0}', space=vmem, size = 0x2000, scoped, tag = 'input window, operand 3, single buffered']
    #allocation10 [shape = 'u8[8192]{0}', space=vmem, size = 0x2000, scoped, tag = 'output window, operand 0, single buffered']
    %9 = vsyncpa [#allocation5], 0
    %10 = vsyncpa [#allocation3], 0
    %11 = vsyncpa [#allocation8], 0
    %12 = vsyncpa [#allocation4], 0
    // Predicated region
    $region2: #{tpu_custom_call.1} parent=1 // pred_check
      _
    $region3: #{tpu_custom_call.1} parent=1 // pred_check_branch
      %14 = sbr.rel (0) target = $region5
    $region4: #{tpu_custom_call.1} parent=1 // pred_region
      %s16 = ssub.s32 16, 16
      %17 = vsyncadd [#allocation5], %s16
      %20 = dma.hbm_to_smem %s0, 16, [#allocation2], [#allocation5]
    $region5: #{tpu_custom_call.1} parent=1 // pred_fallthru
      _
    // Predicated region
    $region6: #{tpu_custom_call.1} parent=1 // pred_check
      _
    $region7: #{tpu_custom_call.1} parent=1 // pred_check_branch
      %22 = sbr.rel (0) target = $region9
    $region8: #{tpu_custom_call.1} parent=1 // pred_region
      %s24 = ssub.s32 256, 256
      %25 = vsyncadd [#allocation3], %s24
      %s27 = sshll.u32 [#allocation6], 4
      %s28 = int_to_ptr.vmem [resolvable:$true] %s27
      %30 = dma.hbm_to_vmem [thread:$0]  %s1, 256, %s28, [#allocation3]
    $region9: #{tpu_custom_call.1} parent=1 // pred_fallthru
      _
    // Predicated region
    $region10: #{tpu_custom_call.1} parent=1 // pred_check
      _
    $region11: #{tpu_custom_call.1} parent=1 // pred_check_branch
      %32 = sbr.rel (0) target = $region13
    $region12: #{tpu_custom_call.1} parent=1 // pred_region
      %s34 = ssub.s32 256, 256
      %35 = vsyncadd [#allocation8], %s34
      %s37 = sshll.u32 [#allocation7], 4
      %s38 = int_to_ptr.vmem [resolvable:$true] %s37
      %40 = dma.hbm_to_vmem [thread:$0]  %s2, 256, %s38, [#allocation8]
    $region13: #{tpu_custom_call.1} parent=1 // pred_fallthru
      _
    // Predicated region
    $region14: #{tpu_custom_call.1} parent=1 // pred_check
      _
    $region15: #{tpu_custom_call.1} parent=1 // pred_check_branch
      %42 = sbr.rel (0) target = $region17
    $region16: #{tpu_custom_call.1} parent=1 // pred_region
      %s44 = ssub.s32 256, 256
      %45 = vsyncadd [#allocation8], %s44
      %s47 = sshll.u32 [#allocation9], 4
      %s48 = int_to_ptr.vmem [resolvable:$true] %s47
      %50 = dma.hbm_to_vmem [thread:$0]  %s3, 256, %s48, [#allocation8]
    $region17: #{tpu_custom_call.1} parent=1 // pred_fallthru
      _
    // Predicated region
    $region18: #{tpu_custom_call.1} parent=1 // pred_check
      _
    $region19: #{tpu_custom_call.1} parent=1 // pred_check_branch
      %52 = sbr.rel (0) target = $region21
    $region20: #{tpu_custom_call.1} parent=1 // pred_region
      %53 = dma.done [#allocation5], 16
    $region21: #{tpu_custom_call.1} parent=1 // pred_fallthru
      _
    // Predicated region
    $region22: #{tpu_custom_call.1} parent=1 // pred_check
      _
    $region23: #{tpu_custom_call.1} parent=1 // pred_check_branch
      %55 = sbr.rel (0) target = $region25
    $region24: #{tpu_custom_call.1} parent=1 // pred_region
      %56 = dma.done [#allocation3], 256
    $region25: #{tpu_custom_call.1} parent=1 // pred_fallthru
      _
    // Predicated region
    $region26: #{tpu_custom_call.1} parent=1 // pred_check
      _
    $region27: #{tpu_custom_call.1} parent=1 // pred_check_branch
      %58 = sbr.rel (0) target = $region29
    $region28: #{tpu_custom_call.1} parent=1 // pred_region
      %59 = dma.done [#allocation8], 256
    $region29: #{tpu_custom_call.1} parent=1 // pred_fallthru
      _
    // Predicated region
    $region30: #{tpu_custom_call.1} parent=1 // pred_check
      _
    $region31: #{tpu_custom_call.1} parent=1 // pred_check_branch
      %61 = sbr.rel (0) target = $region33
    $region32: #{tpu_custom_call.1} parent=1 // pred_region
      %62 = dma.done [#allocation8], 256
    $region33: #{tpu_custom_call.1} parent=1 // pred_fallthru
      _
    %63 = sfence
    %s64 = sld [smem:[#allocation2]]
    %s65 = sld [smem:[#allocation2 + $0x1]]
    %s66 = sld [smem:[#allocation2 + $0x2]]
    %v67 = vld [vmem:[#allocation6] sm:$0xff]
    %v68 = vld [vmem:[#allocation6 + $0x8] sm:$0xff]
    %v69 = vstv %s64
    %v70 = vmul.f32 %v67, %v69
    %v71 = vmul.f32 %v68, %v69
    %v72 = vld [vmem:[#allocation7] sm:$0xff]
    %v73 = vld [vmem:[#allocation7 + $0x8] sm:$0xff]
    %v74 = vstv %s65
    %v75 = vmul.f32 %v72, %v74
    %v76 = vmul.f32 %v73, %v74
    %v77 = vadd.f32 %v70, %v75
    %v78 = vadd.f32 %v71, %v76
    %v79 = vld [vmem:[#allocation9] sm:$0xff]
    %v80 = vld [vmem:[#allocation9 + $0x8] sm:$0xff]
    %v81 = vstv %s66
    %v82 = vmul.f32 %v79, %v81
    %v83 = vmul.f32 %v80, %v81
    %v84 = vadd.f32 %v77, %v82
    %v85 = vadd.f32 %v78, %v83
    %86 = vst [vmem:[#allocation10] sm:$0xff] %v84
    %87 = vst [vmem:[#allocation10 + $0x8] sm:$0xff] %v85
    // Predicated region
    $region34: #{tpu_custom_call.1} parent=1 // pred_check
      _
    $region35: #{tpu_custom_call.1} parent=1 // pred_check_branch
      %89 = sbr.rel (0) target = $region37
    $region36: #{tpu_custom_call.1} parent=1 // pred_region
      %s91 = ssub.s32 256, 256
      %92 = vsyncadd [#allocation4], %s91
      %s94 = sshll.u32 [#allocation10], 4
      %s95 = int_to_ptr.vmem [resolvable:$true] %s94
      %97 = dma.vmem_to_hbm [thread:$0]  %s95, 256, %s4, [#allocation4]
    $region37: #{tpu_custom_call.1} parent=1 // pred_fallthru
      _
    // Predicated region
    $region38: #{tpu_custom_call.1} parent=1 // pred_check
      _
    $region39: #{tpu_custom_call.1} parent=1 // pred_check_branch
      %99 = sbr.rel (0) target = $region41
    $region40: #{tpu_custom_call.1} parent=1 // pred_region
      %100 = dma.done [#allocation4], 256
    $region41: #{tpu_custom_call.1} parent=1 // pred_fallthru
      _
    %101 = vsyncpa [#allocation3], 1
    %102 = vsyncpa [#allocation8], 1
    %103 = vsyncpa [#allocation4], 1
    %104 = vsyncpa [#allocation5], 1

</llo_original>
